<compile_context>
chip_gen: v7x
topology: tpu7x:2x2x1
jax: 0.10.0
libtpu: 0.0.40
codegen_flags: <defaults>
</compile_context>

<pallas_src>
import functools

import jax
import jax.numpy as jnp
from jax.experimental import pallas as pl
from jax.experimental.pallas import tpu as pltpu


def resblock_kernel(x_ref, w1_ref, b1_ref, w2_ref, b2_ref, o_ref):
    x = x_ref[...]                              # (TM, H), input dtype (f32 here)
    x_bf = x.astype(jnp.bfloat16)               # cast only for the MXU path

    # Linear1 + ReLU  (bf16 MXU matmul, f32 accumulation; bias/ReLU in f32)
    h = jnp.dot(x_bf, w1_ref[...], preferred_element_type=jnp.float32) + b1_ref[...]
    h = jnp.maximum(h, 0.0)

    # Dropout: identity in eval mode.

    # Linear2 (bf16 MXU matmul, f32 accumulation)
    y = jnp.dot(h.astype(jnp.bfloat16), w2_ref[...],
                preferred_element_type=jnp.float32) + b2_ref[...]

    # Residual add + ReLU in f32
    o_ref[...] = jnp.maximum(y + x.astype(jnp.float32), 0.0).astype(o_ref.dtype)


@functools.partial(jax.jit, static_argnames=("tm",))
def resblock_forward(x, w1_t, b1, w2_t, b2, *, tm=256):
    """x: (B, H).  w1_t, w2_t: (H_in, H_out) already transposed.  b*: (1, H)."""
    B, H = x.shape

    # Lane-dense hidden dim (multiple of 128) and (8)-aligned batch tile.
    Hp = pl.cdiv(H, 128) * 128
    tm = max(8, min(tm, pl.cdiv(B, 8) * 8))
    Bp = pl.cdiv(B, tm) * tm
    pad_b, pad_h = Bp - B, Hp - H

    if pad_b or pad_h:
        x = jnp.pad(x, ((0, pad_b), (0, pad_h)))
    if pad_h:
        w1_t = jnp.pad(w1_t, ((0, pad_h), (0, pad_h)))
        w2_t = jnp.pad(w2_t, ((0, pad_h), (0, pad_h)))
        b1 = jnp.pad(b1, ((0, 0), (0, pad_h)))
        b2 = jnp.pad(b2, ((0, 0), (0, pad_h)))

    # bf16 weights for MXU / bandwidth; biases stay f32.
    w1_bf = w1_t.astype(jnp.bfloat16)
    w2_bf = w2_t.astype(jnp.bfloat16)
    b1 = b1.astype(jnp.float32)
    b2 = b2.astype(jnp.float32)

    grid = (Bp // tm,)

    # VMEM budget: double-buffered x/out tiles (f32) + resident bf16 weights
    # (conservatively assume 2 buffers each) + biases, with headroom.
    vmem_bytes = (2 * 2 * tm * Hp * 4
                  + 2 * 2 * Hp * Hp * 2
                  + 2 * 2 * Hp * 4)
    vmem_limit = int(min(max(2 * vmem_bytes, 4 << 20), 64 << 20))

    cost = pl.CostEstimate(
        flops=4 * Bp * Hp * Hp,                       # two H x H matmuls
        transcendentals=0,
        bytes_accessed=(2 * Bp * Hp * 4               # x in + out
                        + 2 * Hp * Hp * 2             # two bf16 weights
                        + 2 * Hp * 4),                # biases
    )

    out = pl.pallas_call(
        resblock_kernel,
        out_shape=jax.ShapeDtypeStruct((Bp, Hp), x.dtype),
        grid=grid,
        in_specs=[
            pl.BlockSpec((tm, Hp), lambda i: (i, 0)),   # x tile: streamed
            pl.BlockSpec((Hp, Hp), lambda i: (0, 0)),   # w1: VMEM-resident
            pl.BlockSpec((1, Hp), lambda i: (0, 0)),    # b1
            pl.BlockSpec((Hp, Hp), lambda i: (0, 0)),   # w2: VMEM-resident
            pl.BlockSpec((1, Hp), lambda i: (0, 0)),    # b2
        ],
        out_specs=pl.BlockSpec((tm, Hp), lambda i: (i, 0)),
        compiler_params=pltpu.CompilerParams(
            dimension_semantics=("parallel",),          # batch tiles independent
            vmem_limit_bytes=vmem_limit,
        ),
        cost_estimate=cost,
    )(x, w1_bf, b1, w2_bf, b2)

    if pad_b or pad_h:
        out = out[:B, :H]
    return out


def init_params(key, hidden_dim):
    """Deterministic init mimicking nn.Linear default (uniform(-1/sqrt(in), 1/sqrt(in)))."""
    k1, k2, k3, k4 = jax.random.split(key, 4)
    bound = 1.0 / jnp.sqrt(hidden_dim)
    # PyTorch weight is (out, in); store transposed (in, out) for x @ W_t.
    w1_t = jax.random.uniform(k1, (hidden_dim, hidden_dim), jnp.float32, -bound, bound)
    b1 = jax.random.uniform(k2, (1, hidden_dim), jnp.float32, -bound, bound)
    w2_t = jax.random.uniform(k3, (hidden_dim, hidden_dim), jnp.float32, -bound, bound)
    b2 = jax.random.uniform(k4, (1, hidden_dim), jnp.float32, -bound, bound)
    return w1_t, b1, w2_t, b2


if __name__ == "__main__":
    # Small but TPU-friendly shapes: lane-dense hidden (multiple of 128) and
    # enough batch rows to exercise the batch-grid pipeline (grid = 2 at tm=256).
    batch, hidden_dim = 512, 128
    key = jax.random.PRNGKey(0)
    kx, kp = jax.random.split(key)

    x = jax.random.normal(kx, (batch, hidden_dim), dtype=jnp.float32)
    w1_t, b1, w2_t, b2 = init_params(kp, hidden_dim)

    out = resblock_forward(x, w1_t, b1, w2_t, b2, tm=256)
    out = jax.block_until_ready(out)

    # Reference in plain JAX using the same bf16-inputs / f32-accumulate recipe
    # (dropout = identity in eval mode).
    w1_bf, w2_bf = w1_t.astype(jnp.bfloat16), w2_t.astype(jnp.bfloat16)
    h_ref = jnp.maximum(
        jnp.dot(x.astype(jnp.bfloat16), w1_bf, preferred_element_type=jnp.float32) + b1,
        0.0)
    y_ref = jnp.dot(h_ref.astype(jnp.bfloat16), w2_bf,
                    preferred_element_type=jnp.float32) + b2 + x
    ref = jnp.maximum(y_ref, 0.0)

    assert out.shape == (batch, hidden_dim)
    assert jnp.allclose(out, ref, atol=2e-3, rtol=2e-3), (
        float(jnp.max(jnp.abs(out - ref))))

    print("KERNEL_OK")
</pallas_src>

<mosaic_0001>
module attributes {stable_mosaic.version = 11 : i64} {
  func.func @resblock_kernel(%arg0: i32, %arg1: memref<256x128xf32, #tpu.memory_space<vmem>>, %arg2: memref<128x128xbf16, #tpu.memory_space<vmem>>, %arg3: memref<1x128xf32, #tpu.memory_space<vmem>>, %arg4: memref<128x128xbf16, #tpu.memory_space<vmem>>, %arg5: memref<1x128xf32, #tpu.memory_space<vmem>>, %arg6: memref<256x128xf32, #tpu.memory_space<vmem>>) attributes {dimension_semantics = [#tpu.dimension_semantics<parallel>], iteration_bounds = array<i64: 2>, scalar_prefetch = 0 : i64, scratch_operands = 0 : i64, tpu.core_type = #tpu.core_type<tc>, window_params = [{transform_indices = @transform_0, window_bounds = array<i64: 256, 128>}, {pipeline_mode = #tpu.pipeline_mode<synchronous>, transform_indices = @transform_1, window_bounds = array<i64: 128, 128>}, {pipeline_mode = #tpu.pipeline_mode<synchronous>, transform_indices = @transform_2, window_bounds = array<i64: 1, 128>}, {pipeline_mode = #tpu.pipeline_mode<synchronous>, transform_indices = @transform_3, window_bounds = array<i64: 128, 128>}, {pipeline_mode = #tpu.pipeline_mode<synchronous>, transform_indices = @transform_4, window_bounds = array<i64: 1, 128>}, {transform_indices = @transform_5, window_bounds = array<i64: 256, 128>}]} {
    %c0 = arith.constant 0 : index
    %c0_0 = arith.constant 0 : index
    %0 = vector.load %arg1[%c0, %c0_0] : memref<256x128xf32, #tpu.memory_space<vmem>>, vector<256x128xf32>
    %1 = arith.truncf %0 : vector<256x128xf32> to vector<256x128xbf16>
    %c0_1 = arith.constant 0 : index
    %c0_2 = arith.constant 0 : index
    %2 = vector.load %arg2[%c0_1, %c0_2] : memref<128x128xbf16, #tpu.memory_space<vmem>>, vector<128x128xbf16>
    %cst = arith.constant dense<0.000000e+00> : vector<256x128xf32>
    %3 = tpu.matmul %1, %2, %cst {dimension_numbers = #tpu.dot_dimension_numbers<[1], [0], [0], [1], [0, 0, 1, 1], [], []>} : vector<256x128xbf16>, vector<128x128xbf16>, vector<256x128xf32> -> vector<256x128xf32>
    %c0_3 = arith.constant 0 : index
    %c0_4 = arith.constant 0 : index
    %4 = vector.load %arg3[%c0_3, %c0_4] : memref<1x128xf32, #tpu.memory_space<vmem>>, vector<1x128xf32>
    %5 = vector.broadcast %4 : vector<1x128xf32> to vector<256x128xf32>
    %6 = arith.addf %3, %5 : vector<256x128xf32>
    %cst_5 = arith.constant 0.000000e+00 : f32
    %7 = vector.broadcast %cst_5 : f32 to vector<256x128xf32>
    %8 = arith.maximumf %6, %7 : vector<256x128xf32>
    %9 = arith.truncf %8 : vector<256x128xf32> to vector<256x128xbf16>
    %c0_6 = arith.constant 0 : index
    %c0_7 = arith.constant 0 : index
    %10 = vector.load %arg4[%c0_6, %c0_7] : memref<128x128xbf16, #tpu.memory_space<vmem>>, vector<128x128xbf16>
    %cst_8 = arith.constant dense<0.000000e+00> : vector<256x128xf32>
    %11 = tpu.matmul %9, %10, %cst_8 {dimension_numbers = #tpu.dot_dimension_numbers<[1], [0], [0], [1], [0, 0, 1, 1], [], []>} : vector<256x128xbf16>, vector<128x128xbf16>, vector<256x128xf32> -> vector<256x128xf32>
    %c0_9 = arith.constant 0 : index
    %c0_10 = arith.constant 0 : index
    %12 = vector.load %arg5[%c0_9, %c0_10] : memref<1x128xf32, #tpu.memory_space<vmem>>, vector<1x128xf32>
    %13 = vector.broadcast %12 : vector<1x128xf32> to vector<256x128xf32>
    %14 = arith.addf %11, %13 : vector<256x128xf32>
    %15 = arith.addf %14, %0 : vector<256x128xf32>
    %cst_11 = arith.constant 0.000000e+00 : f32
    %16 = vector.broadcast %cst_11 : f32 to vector<256x128xf32>
    %17 = arith.maximumf %15, %16 : vector<256x128xf32>
    %c0_12 = arith.constant 0 : index
    %c0_13 = arith.constant 0 : index
    %18 = vector.load %arg6[%c0_12, %c0_13] : memref<256x128xf32, #tpu.memory_space<vmem>>, vector<256x128xf32>
    tpu.vector_store %arg6[%c0_12, %c0_13], %17 {strides = array<i32>} : memref<256x128xf32, #tpu.memory_space<vmem>>, vector<256x128xf32>,
    return
  }
  func.func @transform_0(%arg0: i32) -> (i32, i32) {
    %c0_i32 = arith.constant 0 : i32
    %c0_i32_0 = arith.constant 0 : i32
    return %arg0, %c0_i32 : i32, i32
  }
  func.func @transform_1(%arg0: i32) -> (i32, i32) {
    %c0_i32 = arith.constant 0 : i32
    %c0_i32_0 = arith.constant 0 : i32
    %c0_i32_1 = arith.constant 0 : i32
    return %c0_i32, %c0_i32_0 : i32, i32
  }
  func.func @transform_2(%arg0: i32) -> (i32, i32) {
    %c0_i32 = arith.constant 0 : i32
    %c0_i32_0 = arith.constant 0 : i32
    %c0_i32_1 = arith.constant 0 : i32
    return %c0_i32, %c0_i32_0 : i32, i32
  }
  func.func @transform_3(%arg0: i32) -> (i32, i32) {
    %c0_i32 = arith.constant 0 : i32
    %c0_i32_0 = arith.constant 0 : i32
    %c0_i32_1 = arith.constant 0 : i32
    return %c0_i32, %c0_i32_0 : i32, i32
  }
  func.func @transform_4(%arg0: i32) -> (i32, i32) {
    %c0_i32 = arith.constant 0 : i32
    %c0_i32_0 = arith.constant 0 : i32
    %c0_i32_1 = arith.constant 0 : i32
    return %c0_i32, %c0_i32_0 : i32, i32
  }
  func.func @transform_5(%arg0: i32) -> (i32, i32) {
    %c0_i32 = arith.constant 0 : i32
    %c0_i32_0 = arith.constant 0 : i32
    return %arg0, %c0_i32 : i32, i32
  }
}

</mosaic_0001>

<llo_original>
// kernel: resblock_forward.1
$region0: #{resblock_forward.1}
  #allocation0 [shape = 'u32[]', space=smem, size = 0x4, offset = 0x4, fixed_abs, tag = 'smem constant byte address 0x4 - core index']
  #allocation1 [shape = 'u32[144,128]{1,0:T(1,128)}', space=vmem, size = 0x12000, scoped, tag = 'internal scratch']
  %s0 = inlined_call_operand.hbm [shape: f32[512,128], index: 0, kind: input, shape index: {}]
  %s1 = inlined_call_operand.vmem [shape: bf16[128,128], index: 1, kind: input, shape index: {}]
  %s2 = inlined_call_operand.vmem [shape: f32[1,128], index: 2, kind: input, shape index: {}]
  %s3 = inlined_call_operand.vmem [shape: bf16[128,128], index: 3, kind: input, shape index: {}]
  %s4 = inlined_call_operand.vmem [shape: f32[1,128], index: 4, kind: input, shape index: {}]
  %s5 = inlined_call_operand.hbm [shape: f32[512,128], index: 5, kind: output, shape index: {}]
  %s6 = sld [smem:[#allocation0]]
  $region57: #{resblock_forward.1} parent=0
    _
  %s8 = ssub.s32 1, %s6
  %s9 = scalar_select 0, %s8, %s6
  $region1: #{resblock_forward.1} parent=0
    #allocation2 [shape = 'u8[262144]{0}', space=vmem, size = 0x40000, scoped, tag = 'input window, operand 0']
    #allocation3 [shape = 's32[2]{0}', space=sflag, size = 0x8, scoped, tag = 'scoped memory for resblock_forward.1']
    #allocation4 [shape = 's32[2]{0}', space=sflag, size = 0x8, scoped, tag = 'scoped memory for resblock_forward.1']
    #allocation5 [shape = 'u8[262144]{0}', space=vmem, size = 0x40000, scoped, tag = 'output window, operand 0']
    %10 = vsyncpa [#allocation3], 0
    %s11 = scalar_lea.sflag [#allocation3], 1
    %12 = vsyncpa %s11, 0
    %13 = vsyncpa [#allocation4], 0
    %s14 = scalar_lea.sflag [#allocation4], 1
    %15 = vsyncpa %s14, 0
    loop: start=0, step=1, limit=4
    $region2: #{resblock_forward.1} parent=1 // loop_pre_header
      _
    $region3: #{resblock_forward.1} parent=1 // loop_header
      %s17 = sphi 0, %s21
      %p18 = scmp.ge.s32.totalorder %s17, 4
      %s27 = sphi 0, %s29
      %s30 = sphi 0, %s27
      %s31 = sphi 0, %s30
      %s47 = sphi 0, %s31
      %s51 = sphi 0, %s51
      %s53 = sphi 0, %s51
      %s54 = sphi 0, %s53
      %s68 = sphi 0, %s54
      %s72 = sphi 0, %s72
      %s74 = sphi 0, %s72
      %s75 = sphi 0, %s74
      %s89 = sphi 0, %s75
      %s93 = sphi 0, %s93
      %s95 = sphi 0, %s93
      %s96 = sphi 0, %s95
      %s110 = sphi 0, %s96
      %s114 = sphi 0, %s114
      %s116 = sphi 0, %s114
      %s117 = sphi 0, %s116
      %s131 = sphi 0, %s117
      %s137 = sphi 0, %s139
      %s140 = sphi 0, %s137
      %s141 = sphi 0, %s140
      %s157 = sphi 0, %s141
    $region4: #{resblock_forward.1} parent=1 // loop_header_branch
      %20 = sbr.rel (%p18) target = $region8
    $region5: #{resblock_forward.1} parent=1 // loop_body
      %s22 = ssub.s32 %s17, 1
      %s23 = ssub.s32 %s17, 2
      %s24 = sadd.s32 %s17, 1
      %s25 = ssub.s32 %s17, %s24
      %p26 = scmp.eq.s32.totalorder %s25, 0
      %s28 = sadd.s32 %s27, 1
      %s29 = scalar_select %p26, %s27, %s28
      %p32 = pneg %p26
      %p33 = scmp.eq.s32.totalorder %s17, 1
      %p34 = por %p32, %p33
      %p35 = scmp.ne.s32.totalorder %s27, %s30
      %p36 = scmp.eq.s32.totalorder %s17, 0
      %p37 = por %p35, %p36
      %p38 = scmp.ne.s32.totalorder %s27, %s30
      %p39 = scmp.eq.s32.totalorder %s22, 1
      %p40 = por %p38, %p39
      %p41 = scmp.ne.s32.totalorder %s30, %s31
      %p42 = scmp.eq.s32.totalorder %s22, 0
      %p43 = por %p41, %p42
      %p44 = scmp.ne.s32.totalorder %s30, %s31
      %p45 = scmp.eq.s32.totalorder %s23, 1
      %p46 = por %p44, %p45
      %p48 = scmp.ne.s32.totalorder %s31, %s47
      %p49 = scmp.eq.s32.totalorder %s23, 0
      %p50 = por %p48, %p49
      %s52 = sadd.s32 %s51, 1
      %p55 = scmp.eq.s32.totalorder %s17, 1
      %p56 = scmp.ne.s32.totalorder %s51, %s53
      %p57 = scmp.eq.s32.totalorder %s17, 0
      %p58 = por %p56, %p57
      %p59 = scmp.ne.s32.totalorder %s51, %s53
      %p60 = scmp.eq.s32.totalorder %s22, 1
      %p61 = por %p59, %p60
      %p62 = scmp.ne.s32.totalorder %s53, %s54
      %p63 = scmp.eq.s32.totalorder %s22, 0
      %p64 = por %p62, %p63
      %p65 = scmp.ne.s32.totalorder %s53, %s54
      %p66 = scmp.eq.s32.totalorder %s23, 1
      %p67 = por %p65, %p66
      %p69 = scmp.ne.s32.totalorder %s54, %s68
      %p70 = scmp.eq.s32.totalorder %s23, 0
      %p71 = por %p69, %p70
      %s73 = sadd.s32 %s72, 1
      %p76 = scmp.eq.s32.totalorder %s17, 1
      %p77 = scmp.ne.s32.totalorder %s72, %s74
      %p78 = scmp.eq.s32.totalorder %s17, 0
      %p79 = por %p77, %p78
      %p80 = scmp.ne.s32.totalorder %s72, %s74
      %p81 = scmp.eq.s32.totalorder %s22, 1
      %p82 = por %p80, %p81
      %p83 = scmp.ne.s32.totalorder %s74, %s75
      %p84 = scmp.eq.s32.totalorder %s22, 0
      %p85 = por %p83, %p84
      %p86 = scmp.ne.s32.totalorder %s74, %s75
      %p87 = scmp.eq.s32.totalorder %s23, 1
      %p88 = por %p86, %p87
      %p90 = scmp.ne.s32.totalorder %s75, %s89
      %p91 = scmp.eq.s32.totalorder %s23, 0
      %p92 = por %p90, %p91
      %s94 = sadd.s32 %s93, 1
      %p97 = scmp.eq.s32.totalorder %s17, 1
      %p98 = scmp.ne.s32.totalorder %s93, %s95
      %p99 = scmp.eq.s32.totalorder %s17, 0
      %p100 = por %p98, %p99
      %p101 = scmp.ne.s32.totalorder %s93, %s95
      %p102 = scmp.eq.s32.totalorder %s22, 1
      %p103 = por %p101, %p102
      %p104 = scmp.ne.s32.totalorder %s95, %s96
      %p105 = scmp.eq.s32.totalorder %s22, 0
      %p106 = por %p104, %p105
      %p107 = scmp.ne.s32.totalorder %s95, %s96
      %p108 = scmp.eq.s32.totalorder %s23, 1
      %p109 = por %p107, %p108
      %p111 = scmp.ne.s32.totalorder %s96, %s110
      %p112 = scmp.eq.s32.totalorder %s23, 0
      %p113 = por %p111, %p112
      %s115 = sadd.s32 %s114, 1
      %p118 = scmp.eq.s32.totalorder %s17, 1
      %p119 = scmp.ne.s32.totalorder %s114, %s116
      %p120 = scmp.eq.s32.totalorder %s17, 0
      %p121 = por %p119, %p120
      %p122 = scmp.ne.s32.totalorder %s114, %s116
      %p123 = scmp.eq.s32.totalorder %s22, 1
      %p124 = por %p122, %p123
      %p125 = scmp.ne.s32.totalorder %s116, %s117
      %p126 = scmp.eq.s32.totalorder %s22, 0
      %p127 = por %p125, %p126
      %p128 = scmp.ne.s32.totalorder %s116, %s117
      %p129 = scmp.eq.s32.totalorder %s23, 1
      %p130 = por %p128, %p129
      %p132 = scmp.ne.s32.totalorder %s117, %s131
      %p133 = scmp.eq.s32.totalorder %s23, 0
      %p134 = por %p132, %p133
      %s135 = ssub.s32 %s17, %s24
      %p136 = scmp.eq.s32.totalorder %s135, 0
      %s138 = sadd.s32 %s137, 1
      %s139 = scalar_select %p136, %s137, %s138
      %p142 = pneg %p136
      %p143 = scmp.eq.s32.totalorder %s17, 1
      %p144 = por %p142, %p143
      %p145 = scmp.ne.s32.totalorder %s137, %s140
      %p146 = scmp.eq.s32.totalorder %s17, 0
      %p147 = por %p145, %p146
      %p148 = scmp.ne.s32.totalorder %s137, %s140
      %p149 = scmp.eq.s32.totalorder %s22, 1
      %p150 = por %p148, %p149
      %p151 = scmp.ne.s32.totalorder %s140, %s141
      %p152 = scmp.eq.s32.totalorder %s22, 0
      %p153 = por %p151, %p152
      %p154 = scmp.ne.s32.totalorder %s140, %s141
      %p155 = scmp.eq.s32.totalorder %s23, 1
      %p156 = por %p154, %p155
      %p158 = scmp.ne.s32.totalorder %s141, %s157
      %p159 = scmp.eq.s32.totalorder %s23, 0
      %p160 = por %p158, %p159
      %p161 = scmp.le.s32.totalorder 1, %s17
      %p162 = scmp.lt.s32.totalorder %s17, 3
      %p163 = pnand %p161, %p162
      %p164 = pneg %p163
      // Predicated region
      $region9: #{resblock_forward.1} parent=5 // pred_check
        _
      $region10: #{resblock_forward.1} parent=5 // pred_check_branch
        %166 = sbr.rel (%p163) target = $region12
      $region11: #{resblock_forward.1} parent=5 // pred_region
        %s167 = ssub.s32 %s17, 1
        // Predicated region
        $region13: #{resblock_forward.1} parent=11 // pred_check
          %p168 = pneg %p64
        $region14: #{resblock_forward.1} parent=11 // pred_check_branch
          %170 = sbr.rel (%p168) target = $region16
        $region15: #{resblock_forward.1} parent=11 // pred_region
          _
        $region16: #{resblock_forward.1} parent=11 // pred_fallthru
          _
        // Predicated region
        $region17: #{resblock_forward.1} parent=11 // pred_check
          %p171 = pneg %p85
        $region18: #{resblock_forward.1} parent=11 // pred_check_branch
          %173 = sbr.rel (%p171) target = $region20
        $region19: #{resblock_forward.1} parent=11 // pred_region
          _
        $region20: #{resblock_forward.1} parent=11 // pred_fallthru
          _
        // Predicated region
        $region21: #{resblock_forward.1} parent=11 // pred_check
          %p174 = pneg %p106
        $region22: #{resblock_forward.1} parent=11 // pred_check_branch
          %176 = sbr.rel (%p174) target = $region24
        $region23: #{resblock_forward.1} parent=11 // pred_region
          _
        $region24: #{resblock_forward.1} parent=11 // pred_fallthru
          _
        // Predicated region
        $region25: #{resblock_forward.1} parent=11 // pred_check
          %p177 = pneg %p127
        $region26: #{resblock_forward.1} parent=11 // pred_check_branch
          %179 = sbr.rel (%p177) target = $region28
        $region27: #{resblock_forward.1} parent=11 // pred_region
          _
        $region28: #{resblock_forward.1} parent=11 // pred_fallthru
          _
      $region12: #{resblock_forward.1} parent=5 // pred_fallthru
        _
      %p180 = scmp.lt.s32.totalorder %s17, 2
      // Predicated region
      $region29: #{resblock_forward.1} parent=5 // pred_check
        %p181 = pneg %p180
      $region30: #{resblock_forward.1} parent=5 // pred_check_branch
        %183 = sbr.rel (%p181) target = $region32
      $region31: #{resblock_forward.1} parent=5 // pred_region
        // Predicated region
        $region33: #{resblock_forward.1} parent=31 // pred_check
          %p184 = pneg %p37
        $region34: #{resblock_forward.1} parent=31 // pred_check_branch
          %186 = sbr.rel (%p184) target = $region36
        $region35: #{resblock_forward.1} parent=31 // pred_region
          %s187 = sand.u32 %s27, 1
          %s188 = scalar_lea.sflag [#allocation3], %s187
          %s189 = sand.u32 %s27, 1
          %s190 = smul.addr %s189, 256
          %s191 = scalar_lea.vmem [#allocation2], %s190
          %s192 = smul.u32 32, %s17
          %s194 = ssub.s32 4096, 4096
          %195 = vsyncadd %s188, %s194
          %s196 = smul.addr %s192, 128
          %s197 = scalar_lea.hbm %s0, %s196
          %s198 = sshll.u32 %s191, 4
          %s199 = int_to_ptr.vmem [resolvable:$true] %s198
          %204 = dma.hbm_to_vmem [thread:$0]  %s197, 4096, %s199, %s188, 128, 128, 8
        $region36: #{resblock_forward.1} parent=31 // pred_fallthru
          _
      $region32: #{resblock_forward.1} parent=5 // pred_fallthru
        _
      %p205 = scmp.le.s32.totalorder 1, %s17
      %p206 = scmp.lt.s32.totalorder %s17, 3
      %p207 = pnand %p205, %p206
      %p208 = pneg %p207
      // Predicated region
      $region37: #{resblock_forward.1} parent=5 // pred_check
        _
      $region38: #{resblock_forward.1} parent=5 // pred_check_branch
        %210 = sbr.rel (%p207) target = $region40
      $region39: #{resblock_forward.1} parent=5 // pred_region
        %s211 = ssub.s32 %s17, 1
        %s212 = sand.u32 %s30, 1
        %s213 = scalar_lea.sflag [#allocation3], %s212
        %s214 = sand.u32 %s30, 1
        %s215 = smul.addr %s214, 256
        %s216 = scalar_lea.vmem [#allocation2], %s215
        // Predicated region
        $region41: #{resblock_forward.1} parent=39 // pred_check
          %p217 = pneg %p43
        $region42: #{resblock_forward.1} parent=39 // pred_check_branch
          %219 = sbr.rel (%p217) target = $region44
        $region43: #{resblock_forward.1} parent=39 // pred_region
          %220 = dma.done %s213, 4096
        $region44: #{resblock_forward.1} parent=39 // pred_fallthru
          _
        %s221 = sand.u32 %s30, 1
        %s222 = scalar_lea.sflag [#allocation3], %s221
        %s223 = sand.u32 %s30, 1
        %s224 = smul.addr %s223, 256
        %s225 = scalar_lea.vmem [#allocation2], %s224
        %p226 = pneg %p43
        %p227 = pneg %p40
        %p228 = pneg %p64
        %p229 = pneg %p61
        %p230 = pneg %p85
        %p231 = pneg %p82
        %p232 = pneg %p106
        %p233 = pneg %p103
        %p234 = pneg %p127
        %p235 = pneg %p124
        %p236 = pneg %p153
        %p237 = pneg %p150
        %s238 = sand.u32 %s140, 1
        %s239 = scalar_lea.sflag [#allocation4], %s238
        %s240 = sand.u32 %s140, 1
        %s241 = smul.addr %s240, 256
        %s242 = scalar_lea.vmem [#allocation5], %s241
        %s243 = smul.u32 32, %s22
        %s244 = smul.u32 32, %s22
        %v246 = vld [vmem:[%s216] sm:$0xff]
        %v247 = vld [vmem:[%s216 + $0x8] sm:$0xff]
        %v248 = vld [vmem:[%s216 + $0x10] sm:$0xff]
        %v249 = vld [vmem:[%s216 + $0x18] sm:$0xff]
        %v250 = vld [vmem:[%s216 + $0x20] sm:$0xff]
        %v251 = vld [vmem:[%s216 + $0x28] sm:$0xff]
        %v252 = vld [vmem:[%s216 + $0x30] sm:$0xff]
        %v253 = vld [vmem:[%s216 + $0x38] sm:$0xff]
        %v254 = vld [vmem:[%s216 + $0x40] sm:$0xff]
        %v255 = vld [vmem:[%s216 + $0x48] sm:$0xff]
        %v256 = vld [vmem:[%s216 + $0x50] sm:$0xff]
        %v257 = vld [vmem:[%s216 + $0x58] sm:$0xff]
        %v258 = vld [vmem:[%s216 + $0x60] sm:$0xff]
        %v259 = vld [vmem:[%s216 + $0x68] sm:$0xff]
        %v260 = vld [vmem:[%s216 + $0x70] sm:$0xff]
        %v261 = vld [vmem:[%s216 + $0x78] sm:$0xff]
        %v262 = vld [vmem:[%s216 + $0x80] sm:$0xff]
        %v263 = vld [vmem:[%s216 + $0x88] sm:$0xff]
        %v264 = vld [vmem:[%s216 + $0x90] sm:$0xff]
        %v265 = vld [vmem:[%s216 + $0x98] sm:$0xff]
        %v266 = vld [vmem:[%s216 + $0xa0] sm:$0xff]
        %v267 = vld [vmem:[%s216 + $0xa8] sm:$0xff]
        %v268 = vld [vmem:[%s216 + $0xb0] sm:$0xff]
        %v269 = vld [vmem:[%s216 + $0xb8] sm:$0xff]
        %v270 = vld [vmem:[%s216 + $0xc0] sm:$0xff]
        %v271 = vld [vmem:[%s216 + $0xc8] sm:$0xff]
        %v272 = vld [vmem:[%s216 + $0xd0] sm:$0xff]
        %v273 = vld [vmem:[%s216 + $0xd8] sm:$0xff]
        %v274 = vld [vmem:[%s216 + $0xe0] sm:$0xff]
        %v275 = vld [vmem:[%s216 + $0xe8] sm:$0xff]
        %v276 = vld [vmem:[%s216 + $0xf0] sm:$0xff]
        %v277 = vld [vmem:[%s216 + $0xf8] sm:$0xff]
        %v278 = vpack.c.bf16 %v247, %v246
        %v279 = vpack.c.bf16 %v249, %v248
        %v280 = vpack.c.bf16 %v251, %v250
        %v281 = vpack.c.bf16 %v253, %v252
        %v282 = vpack.c.bf16 %v255, %v254
        %v283 = vpack.c.bf16 %v257, %v256
        %v284 = vpack.c.bf16 %v259, %v258
        %v285 = vpack.c.bf16 %v261, %v260
        %v286 = vpack.c.bf16 %v263, %v262
        %v287 = vpack.c.bf16 %v265, %v264
        %v288 = vpack.c.bf16 %v267, %v266
        %v289 = vpack.c.bf16 %v269, %v268
        %v290 = vpack.c.bf16 %v271, %v270
        %v291 = vpack.c.bf16 %v273, %v272
        %v292 = vpack.c.bf16 %v275, %v274
        %v293 = vpack.c.bf16 %v277, %v276
        %v294 = vld [vmem:[%s1] sm:$0xf]
        %v295 = vld [vmem:[%s1 + $0x4] sm:$0xf]
        %v296 = vld [vmem:[%s1 + $0x8] sm:$0xf]
        %v297 = vld [vmem:[%s1 + $0xc] sm:$0xf]
        %v298 = vld [vmem:[%s1 + $0x10] sm:$0xf]
        %v299 = vld [vmem:[%s1 + $0x14] sm:$0xf]
        %v300 = vld [vmem:[%s1 + $0x18] sm:$0xf]
        %v301 = vld [vmem:[%s1 + $0x1c] sm:$0xf]
        %v302 = vld [vmem:[%s1 + $0x20] sm:$0xf]
        %v303 = vld [vmem:[%s1 + $0x24] sm:$0xf]
        %v304 = vld [vmem:[%s1 + $0x28] sm:$0xf]
        %v305 = vld [vmem:[%s1 + $0x2c] sm:$0xf]
        %v306 = vld [vmem:[%s1 + $0x30] sm:$0xf]
        %v307 = vld [vmem:[%s1 + $0x34] sm:$0xf]
        %v308 = vld [vmem:[%s1 + $0x38] sm:$0xf]
        %v309 = vld [vmem:[%s1 + $0x3c] sm:$0xf]
        %v310 = vld [vmem:[%s2] sm:$0x1]
        %v312 = vlaneseq
        %v313 = vshrl.u32 %v312, 7
        %v314 = vsub.s32 0, %v313
        %v315 = vrot.slane %v310, %v314
        %v333 = vunpack.c.l.b16 %v294
        %v334 = vunpack.c.l.b16 %v295
        %v335 = vunpack.c.l.b16 %v296
        %v336 = vunpack.c.l.b16 %v297
        %v337 = vunpack.c.l.b16 %v298
        %v338 = vunpack.c.l.b16 %v299
        %v339 = vunpack.c.l.b16 %v300
        %v340 = vunpack.c.l.b16 %v301
        %v341 = vunpack.c.l.b16 %v302
        %v342 = vunpack.c.l.b16 %v303
        %v343 = vunpack.c.l.b16 %v304
        %v344 = vunpack.c.l.b16 %v305
        %v345 = vunpack.c.l.b16 %v306
        %v346 = vunpack.c.l.b16 %v307
        %v347 = vunpack.c.l.b16 %v308
        %v348 = vunpack.c.l.b16 %v309
        %v349 = vpack.c.b16 %v334, %v333
        %v350 = vpack.c.b16 %v336, %v335
        %v351 = vpack.c.b16 %v338, %v337
        %v352 = vpack.c.b16 %v340, %v339
        %v353 = vpack.c.b16 %v342, %v341
        %v354 = vpack.c.b16 %v344, %v343
        %v355 = vpack.c.b16 %v346, %v345
        %v356 = vpack.c.b16 %v348, %v347
        %365 = vmatprep.subr.bf16.mxu0 0
        %366 = vmatpush1.bf16.msra.mxu0 %v349
        %367 = vmatprep.subr.bf16.mxu0 0
        %368 = vmatpush1.bf16.msra.mxu0 %v350
        %369 = vmatprep.subr.bf16.mxu0 0
        %370 = vmatpush1.bf16.msra.mxu0 %v351
        %371 = vmatprep.subr.bf16.mxu0 0
        %372 = vmatpush1.bf16.msra.mxu0 %v352
        %373 = vmatprep.subr.bf16.mxu0 0
        %374 = vmatpush1.bf16.msra.mxu0 %v353
        %375 = vmatprep.subr.bf16.mxu0 0
        %376 = vmatpush1.bf16.msra.mxu0 %v354
        %377 = vmatprep.subr.bf16.mxu0 0
        %378 = vmatpush1.bf16.msra.mxu0 %v355
        %379 = vmatprep.subr.bf16.mxu0 0
        %380 = vmatpush1.bf16.msra.mxu0 %v356
        %381 = vmatprep.subr.bf16.mxu0 0
        %382 = vmatpush1.bf16.msra.mxu0 0
        %383 = vmatprep.subr.bf16.mxu0 0
        %384 = vmatpush1.bf16.msra.mxu0 0
        %385 = vmatprep.subr.bf16.mxu0 0
        %386 = vmatpush1.bf16.msra.mxu0 0
        %387 = vmatprep.subr.bf16.mxu0 0
        %388 = vmatpush1.bf16.msra.mxu0 0
        %389 = vmatprep.subr.bf16.mxu0 0
        %390 = vmatpush1.bf16.msra.mxu0 0
        %391 = vmatprep.subr.bf16.mxu0 0
        %392 = vmatpush1.bf16.msra.mxu0 0
        %393 = vmatprep.subr.bf16.mxu0 0
        %394 = vmatpush1.bf16.msra.mxu0 0
        %395 = vmatprep.subr.bf16.mxu0 0
        %396 = vmatpush1.bf16.msra.mxu0 0
        %397 = vmatprep.mubr.bf16.mxu0 0
        %398 = vmatmul.mubr.bf16.gmra.mrb[0].mxu0 %v278
        %v399 = vpop.f32.mrb[0].mxu0
        %v400 = vadd.f32 %v315, %v399
        %v401 = vpop.f32.mrb[0].mxu0
        %v402 = vpop.f32.mrb[0].mxu0
        %v403 = vadd.f32 %v315, %v402
        %v404 = vpop.f32.mrb[0].mxu0
        %405 = vmatprep.mubr.bf16.mxu0 0
        %406 = vmatmul.mubr.bf16.gmra.mrb[0].mxu0 %v279
        %v407 = vpop.f32.mrb[0].mxu0
        %v408 = vadd.f32 %v315, %v407
        %v409 = vpop.f32.mrb[0].mxu0
        %v410 = vpop.f32.mrb[0].mxu0
        %v411 = vadd.f32 %v315, %v410
        %v412 = vpop.f32.mrb[0].mxu0
        %413 = vmatprep.mubr.bf16.mxu0 0
        %414 = vmatmul.mubr.bf16.gmra.mrb[0].mxu0 %v280
        %v415 = vpop.f32.mrb[0].mxu0
        %v416 = vadd.f32 %v315, %v415
        %v417 = vpop.f32.mrb[0].mxu0
        %v418 = vpop.f32.mrb[0].mxu0
        %v419 = vadd.f32 %v315, %v418
        %v420 = vpop.f32.mrb[0].mxu0
        %421 = vmatprep.mubr.bf16.mxu0 0
        %422 = vmatmul.mubr.bf16.gmra.mrb[0].mxu0 %v281
        %v423 = vpop.f32.mrb[0].mxu0
        %v424 = vadd.f32 %v315, %v423
        %v425 = vpop.f32.mrb[0].mxu0
        %v426 = vpop.f32.mrb[0].mxu0
        %v427 = vadd.f32 %v315, %v426
        %v428 = vpop.f32.mrb[0].mxu0
        %429 = vmatprep.mubr.bf16.mxu0 0
        %430 = vmatmul.mubr.bf16.gmra.mrb[0].mxu0 %v282
        %v431 = vpop.f32.mrb[0].mxu0
        %v432 = vadd.f32 %v315, %v431
        %v433 = vpop.f32.mrb[0].mxu0
        %v434 = vpop.f32.mrb[0].mxu0
        %v435 = vadd.f32 %v315, %v434
        %v436 = vpop.f32.mrb[0].mxu0
        %437 = vmatprep.mubr.bf16.mxu0 0
        %438 = vmatmul.mubr.bf16.gmra.mrb[0].mxu0 %v283
        %v439 = vpop.f32.mrb[0].mxu0
        %v440 = vadd.f32 %v315, %v439
        %v441 = vpop.f32.mrb[0].mxu0
        %v442 = vpop.f32.mrb[0].mxu0
        %v443 = vadd.f32 %v315, %v442
        %v444 = vpop.f32.mrb[0].mxu0
        %445 = vmatprep.mubr.bf16.mxu0 0
        %446 = vmatmul.mubr.bf16.gmra.mrb[0].mxu0 %v284
        %v447 = vpop.f32.mrb[0].mxu0
        %v448 = vadd.f32 %v315, %v447
        %v449 = vpop.f32.mrb[0].mxu0
        %v450 = vpop.f32.mrb[0].mxu0
        %v451 = vadd.f32 %v315, %v450
        %v452 = vpop.f32.mrb[0].mxu0
        %453 = vmatprep.mubr.bf16.mxu0 0
        %454 = vmatmul.mubr.bf16.gmra.mrb[0].mxu0 %v285
        %v455 = vpop.f32.mrb[0].mxu0
        %v456 = vadd.f32 %v315, %v455
        %v457 = vpop.f32.mrb[0].mxu0
        %v458 = vpop.f32.mrb[0].mxu0
        %v459 = vadd.f32 %v315, %v458
        %v460 = vpop.f32.mrb[0].mxu0
        %461 = vmatprep.mubr.bf16.mxu0 0
        %462 = vmatmul.mubr.bf16.gmra.mrb[0].mxu0 %v286
        %v463 = vpop.f32.mrb[0].mxu0
        %v464 = vadd.f32 %v315, %v463
        %v465 = vpop.f32.mrb[0].mxu0
        %v466 = vpop.f32.mrb[0].mxu0
        %v467 = vadd.f32 %v315, %v466
        %v468 = vpop.f32.mrb[0].mxu0
        %469 = vmatprep.mubr.bf16.mxu0 0
        %470 = vmatmul.mubr.bf16.gmra.mrb[0].mxu0 %v287
        %v471 = vpop.f32.mrb[0].mxu0
        %v472 = vadd.f32 %v315, %v471
        %v473 = vpop.f32.mrb[0].mxu0
        %v474 = vpop.f32.mrb[0].mxu0
        %v475 = vadd.f32 %v315, %v474
        %v476 = vpop.f32.mrb[0].mxu0
        %477 = vmatprep.mubr.bf16.mxu0 0
        %478 = vmatmul.mubr.bf16.gmra.mrb[0].mxu0 %v288
        %v479 = vpop.f32.mrb[0].mxu0
        %v480 = vadd.f32 %v315, %v479
        %v481 = vpop.f32.mrb[0].mxu0
        %v482 = vpop.f32.mrb[0].mxu0
        %v483 = vadd.f32 %v315, %v482
        %v484 = vpop.f32.mrb[0].mxu0
        %485 = vmatprep.mubr.bf16.mxu0 0
        %486 = vmatmul.mubr.bf16.gmra.mrb[0].mxu0 %v289
        %v487 = vpop.f32.mrb[0].mxu0
        %v488 = vadd.f32 %v315, %v487
        %v489 = vpop.f32.mrb[0].mxu0
        %v490 = vpop.f32.mrb[0].mxu0
        %v491 = vadd.f32 %v315, %v490
        %v492 = vpop.f32.mrb[0].mxu0
        %493 = vmatprep.mubr.bf16.mxu0 0
        %494 = vmatmul.mubr.bf16.gmra.mrb[0].mxu0 %v290
        %v495 = vpop.f32.mrb[0].mxu0
        %v496 = vadd.f32 %v315, %v495
        %v497 = vpop.f32.mrb[0].mxu0
        %v498 = vpop.f32.mrb[0].mxu0
        %v499 = vadd.f32 %v315, %v498
        %v500 = vpop.f32.mrb[0].mxu0
        %501 = vmatprep.mubr.bf16.mxu0 0
        %502 = vmatmul.mubr.bf16.gmra.mrb[0].mxu0 %v291
        %v503 = vpop.f32.mrb[0].mxu0
        %v504 = vadd.f32 %v315, %v503
        %v505 = vpop.f32.mrb[0].mxu0
        %v506 = vpop.f32.mrb[0].mxu0
        %v507 = vadd.f32 %v315, %v506
        %v508 = vpop.f32.mrb[0].mxu0
        %509 = vmatprep.mubr.bf16.mxu0 0
        %510 = vmatmul.mubr.bf16.gmra.mrb[0].mxu0 %v292
        %v511 = vpop.f32.mrb[0].mxu0
        %v512 = vadd.f32 %v315, %v511
        %v513 = vpop.f32.mrb[0].mxu0
        %v514 = vpop.f32.mrb[0].mxu0
        %v515 = vadd.f32 %v315, %v514
        %v516 = vpop.f32.mrb[0].mxu0
        %517 = vmatprep.mubr.bf16.mxu0 0
        %518 = vmatmul.mubr.bf16.gmra.mrb[0].mxu0 %v293
        %v519 = vpop.f32.mrb[0].mxu0
        %v520 = vadd.f32 %v315, %v519
        %v521 = vpop.f32.mrb[0].mxu0
        %v522 = vpop.f32.mrb[0].mxu0
        %v523 = vadd.f32 %v315, %v522
        %v524 = vpop.f32.mrb[0].mxu0
        %525 = vdwg.mxu0
        %v526 = vmax.f32 %v400, 0.0
        %v527 = vmax.f32 %v403, 0.0
        %v528 = vmax.f32 %v408, 0.0
        %v529 = vmax.f32 %v411, 0.0
        %v530 = vmax.f32 %v416, 0.0
        %v531 = vmax.f32 %v419, 0.0
        %v532 = vmax.f32 %v424, 0.0
        %v533 = vmax.f32 %v427, 0.0
        %v534 = vmax.f32 %v432, 0.0
        %v535 = vmax.f32 %v435, 0.0
        %v536 = vmax.f32 %v440, 0.0
        %v537 = vmax.f32 %v443, 0.0
        %v538 = vmax.f32 %v448, 0.0
        %v539 = vmax.f32 %v451, 0.0
        %v540 = vmax.f32 %v456, 0.0
        %v541 = vmax.f32 %v459, 0.0
        %v542 = vmax.f32 %v464, 0.0
        %v543 = vmax.f32 %v467, 0.0
        %v544 = vmax.f32 %v472, 0.0
        %v545 = vmax.f32 %v475, 0.0
        %v546 = vmax.f32 %v480, 0.0
        %v547 = vmax.f32 %v483, 0.0
        %v548 = vmax.f32 %v488, 0.0
        %v549 = vmax.f32 %v491, 0.0
        %v550 = vmax.f32 %v496, 0.0
        %v551 = vmax.f32 %v499, 0.0
        %v552 = vmax.f32 %v504, 0.0
        %v553 = vmax.f32 %v507, 0.0
        %v554 = vmax.f32 %v512, 0.0
        %v555 = vmax.f32 %v515, 0.0
        %v556 = vmax.f32 %v520, 0.0
        %v557 = vmax.f32 %v523, 0.0
        %v558 = vpack.c.bf16 %v527, %v526
        %v559 = vpack.c.bf16 %v529, %v528
        %v560 = vpack.c.bf16 %v531, %v530
        %v561 = vpack.c.bf16 %v533, %v532
        %v562 = vpack.c.bf16 %v535, %v534
        %v563 = vpack.c.bf16 %v537, %v536
        %v564 = vpack.c.bf16 %v539, %v538
        %v565 = vpack.c.bf16 %v541, %v540
        %v566 = vpack.c.bf16 %v543, %v542
        %v567 = vpack.c.bf16 %v545, %v544
        %v568 = vpack.c.bf16 %v547, %v546
        %v569 = vpack.c.bf16 %v549, %v548
        %v570 = vpack.c.bf16 %v551, %v550
        %v571 = vpack.c.bf16 %v553, %v552
        %v572 = vpack.c.bf16 %v555, %v554
        %v573 = vpack.c.bf16 %v557, %v556
        %v574 = vld [vmem:[%s3] sm:$0xf]
        %v575 = vld [vmem:[%s3 + $0x4] sm:$0xf]
        %v576 = vld [vmem:[%s3 + $0x8] sm:$0xf]
        %v577 = vld [vmem:[%s3 + $0xc] sm:$0xf]
        %v578 = vld [vmem:[%s3 + $0x10] sm:$0xf]
        %v579 = vld [vmem:[%s3 + $0x14] sm:$0xf]
        %v580 = vld [vmem:[%s3 + $0x18] sm:$0xf]
        %v581 = vld [vmem:[%s3 + $0x1c] sm:$0xf]
        %v582 = vld [vmem:[%s3 + $0x20] sm:$0xf]
        %v583 = vld [vmem:[%s3 + $0x24] sm:$0xf]
        %v584 = vld [vmem:[%s3 + $0x28] sm:$0xf]
        %v585 = vld [vmem:[%s3 + $0x2c] sm:$0xf]
        %v586 = vld [vmem:[%s3 + $0x30] sm:$0xf]
        %v587 = vld [vmem:[%s3 + $0x34] sm:$0xf]
        %v588 = vld [vmem:[%s3 + $0x38] sm:$0xf]
        %v589 = vld [vmem:[%s3 + $0x3c] sm:$0xf]
        %v590 = vld [vmem:[%s4] sm:$0x1]
        %v592 = vlaneseq
        %v593 = vshrl.u32 %v592, 7
        %v594 = vsub.s32 0, %v593
        %v595 = vrot.slane %v590, %v594
        %v613 = vunpack.c.l.b16 %v574
        %v614 = vunpack.c.l.b16 %v575
        %v615 = vunpack.c.l.b16 %v576
        %v616 = vunpack.c.l.b16 %v577
        %v617 = vunpack.c.l.b16 %v578
        %v618 = vunpack.c.l.b16 %v579
        %v619 = vunpack.c.l.b16 %v580
        %v620 = vunpack.c.l.b16 %v581
        %v621 = vunpack.c.l.b16 %v582
        %v622 = vunpack.c.l.b16 %v583
        %v623 = vunpack.c.l.b16 %v584
        %v624 = vunpack.c.l.b16 %v585
        %v625 = vunpack.c.l.b16 %v586
        %v626 = vunpack.c.l.b16 %v587
        %v627 = vunpack.c.l.b16 %v588
        %v628 = vunpack.c.l.b16 %v589
        %v629 = vpack.c.b16 %v614, %v613
        %v630 = vpack.c.b16 %v616, %v615
        %v631 = vpack.c.b16 %v618, %v617
        %v632 = vpack.c.b16 %v620, %v619
        %v633 = vpack.c.b16 %v622, %v621
        %v634 = vpack.c.b16 %v624, %v623
        %v635 = vpack.c.b16 %v626, %v625
        %v636 = vpack.c.b16 %v628, %v627
        %645 = vmatprep.subr.bf16.mxu0 0
        %646 = vmatpush1.bf16.msra.mxu0 %v629
        %647 = vmatprep.subr.bf16.mxu0 0
        %648 = vmatpush1.bf16.msra.mxu0 %v630
        %649 = vmatprep.subr.bf16.mxu0 0
        %650 = vmatpush1.bf16.msra.mxu0 %v631
        %651 = vmatprep.subr.bf16.mxu0 0
        %652 = vmatpush1.bf16.msra.mxu0 %v632
        %653 = vmatprep.subr.bf16.mxu0 0
        %654 = vmatpush1.bf16.msra.mxu0 %v633
        %655 = vmatprep.subr.bf16.mxu0 0
        %656 = vmatpush1.bf16.msra.mxu0 %v634
        %657 = vmatprep.subr.bf16.mxu0 0
        %658 = vmatpush1.bf16.msra.mxu0 %v635
        %659 = vmatprep.subr.bf16.mxu0 0
        %660 = vmatpush1.bf16.msra.mxu0 %v636
        %661 = vmatprep.subr.bf16.mxu0 0
        %662 = vmatpush1.bf16.msra.mxu0 0
        %663 = vmatprep.subr.bf16.mxu0 0
        %664 = vmatpush1.bf16.msra.mxu0 0
        %665 = vmatprep.subr.bf16.mxu0 0
        %666 = vmatpush1.bf16.msra.mxu0 0
        %667 = vmatprep.subr.bf16.mxu0 0
        %668 = vmatpush1.bf16.msra.mxu0 0
        %669 = vmatprep.subr.bf16.mxu0 0
        %670 = vmatpush1.bf16.msra.mxu0 0
        %671 = vmatprep.subr.bf16.mxu0 0
        %672 = vmatpush1.bf16.msra.mxu0 0
        %673 = vmatprep.subr.bf16.mxu0 0
        %674 = vmatpush1.bf16.msra.mxu0 0
        %675 = vmatprep.subr.bf16.mxu0 0
        %676 = vmatpush1.bf16.msra.mxu0 0
        %677 = vmatprep.mubr.bf16.mxu0 0
        %678 = vmatmul.mubr.bf16.gmra.mrb[0].mxu0 %v558
        %v679 = vpop.f32.mrb[0].mxu0
        %v680 = vadd.f32 %v595, %v679
        %v681 = vpop.f32.mrb[0].mxu0
        %v682 = vpop.f32.mrb[0].mxu0
        %v683 = vadd.f32 %v595, %v682
        %v684 = vpop.f32.mrb[0].mxu0
        %685 = vmatprep.mubr.bf16.mxu0 0
        %686 = vmatmul.mubr.bf16.gmra.mrb[0].mxu0 %v559
        %v687 = vpop.f32.mrb[0].mxu0
        %v688 = vadd.f32 %v595, %v687
        %v689 = vpop.f32.mrb[0].mxu0
        %v690 = vpop.f32.mrb[0].mxu0
        %v691 = vadd.f32 %v595, %v690
        %v692 = vpop.f32.mrb[0].mxu0
        %693 = vmatprep.mubr.bf16.mxu0 0
        %694 = vmatmul.mubr.bf16.gmra.mrb[0].mxu0 %v560
        %v695 = vpop.f32.mrb[0].mxu0
        %v696 = vadd.f32 %v595, %v695
        %v697 = vpop.f32.mrb[0].mxu0
        %v698 = vpop.f32.mrb[0].mxu0
        %v699 = vadd.f32 %v595, %v698
        %v700 = vpop.f32.mrb[0].mxu0
        %701 = vmatprep.mubr.bf16.mxu0 0
        %702 = vmatmul.mubr.bf16.gmra.mrb[0].mxu0 %v561
        %v703 = vpop.f32.mrb[0].mxu0
        %v704 = vadd.f32 %v595, %v703
        %v705 = vpop.f32.mrb[0].mxu0
        %v706 = vpop.f32.mrb[0].mxu0
        %v707 = vadd.f32 %v595, %v706
        %v708 = vpop.f32.mrb[0].mxu0
        %709 = vmatprep.mubr.bf16.mxu0 0
        %710 = vmatmul.mubr.bf16.gmra.mrb[0].mxu0 %v562
        %v711 = vpop.f32.mrb[0].mxu0
        %v712 = vadd.f32 %v595, %v711
        %v713 = vpop.f32.mrb[0].mxu0
        %v714 = vpop.f32.mrb[0].mxu0
        %v715 = vadd.f32 %v595, %v714
        %v716 = vpop.f32.mrb[0].mxu0
        %717 = vmatprep.mubr.bf16.mxu0 0
        %718 = vmatmul.mubr.bf16.gmra.mrb[0].mxu0 %v563
        %v719 = vpop.f32.mrb[0].mxu0
        %v720 = vadd.f32 %v595, %v719
        %v721 = vpop.f32.mrb[0].mxu0
        %v722 = vpop.f32.mrb[0].mxu0
        %v723 = vadd.f32 %v595, %v722
        %v724 = vpop.f32.mrb[0].mxu0
        %725 = vmatprep.mubr.bf16.mxu0 0
        %726 = vmatmul.mubr.bf16.gmra.mrb[0].mxu0 %v564
        %v727 = vpop.f32.mrb[0].mxu0
        %v728 = vadd.f32 %v595, %v727
        %v729 = vpop.f32.mrb[0].mxu0
        %v730 = vpop.f32.mrb[0].mxu0
        %v731 = vadd.f32 %v595, %v730
        %v732 = vpop.f32.mrb[0].mxu0
        %733 = vmatprep.mubr.bf16.mxu0 0
        %734 = vmatmul.mubr.bf16.gmra.mrb[0].mxu0 %v565
        %v735 = vpop.f32.mrb[0].mxu0
        %v736 = vadd.f32 %v595, %v735
        %v737 = vpop.f32.mrb[0].mxu0
        %v738 = vpop.f32.mrb[0].mxu0
        %v739 = vadd.f32 %v595, %v738
        %v740 = vpop.f32.mrb[0].mxu0
        %741 = vmatprep.mubr.bf16.mxu0 0
        %742 = vmatmul.mubr.bf16.gmra.mrb[0].mxu0 %v566
        %v743 = vpop.f32.mrb[0].mxu0
        %v744 = vadd.f32 %v595, %v743
        %v745 = vpop.f32.mrb[0].mxu0
        %v746 = vpop.f32.mrb[0].mxu0
        %v747 = vadd.f32 %v595, %v746
        %v748 = vpop.f32.mrb[0].mxu0
        %749 = vmatprep.mubr.bf16.mxu0 0
        %750 = vmatmul.mubr.bf16.gmra.mrb[0].mxu0 %v567
        %v751 = vpop.f32.mrb[0].mxu0
        %v752 = vadd.f32 %v595, %v751
        %v753 = vpop.f32.mrb[0].mxu0
        %v754 = vpop.f32.mrb[0].mxu0
        %v755 = vadd.f32 %v595, %v754
        %v756 = vpop.f32.mrb[0].mxu0
        %757 = vmatprep.mubr.bf16.mxu0 0
        %758 = vmatmul.mubr.bf16.gmra.mrb[0].mxu0 %v568
        %v759 = vpop.f32.mrb[0].mxu0
        %v760 = vadd.f32 %v595, %v759
        %v761 = vpop.f32.mrb[0].mxu0
        %v762 = vpop.f32.mrb[0].mxu0
        %v763 = vadd.f32 %v595, %v762
        %v764 = vpop.f32.mrb[0].mxu0
        %765 = vmatprep.mubr.bf16.mxu0 0
        %766 = vmatmul.mubr.bf16.gmra.mrb[0].mxu0 %v569
        %v767 = vpop.f32.mrb[0].mxu0
        %v768 = vadd.f32 %v595, %v767
        %v769 = vpop.f32.mrb[0].mxu0
        %v770 = vpop.f32.mrb[0].mxu0
        %v771 = vadd.f32 %v595, %v770
        %v772 = vpop.f32.mrb[0].mxu0
        %773 = vmatprep.mubr.bf16.mxu0 0
        %774 = vmatmul.mubr.bf16.gmra.mrb[0].mxu0 %v570
        %v775 = vpop.f32.mrb[0].mxu0
        %v776 = vadd.f32 %v595, %v775
        %v777 = vpop.f32.mrb[0].mxu0
        %v778 = vpop.f32.mrb[0].mxu0
        %v779 = vadd.f32 %v595, %v778
        %v780 = vpop.f32.mrb[0].mxu0
        %781 = vmatprep.mubr.bf16.mxu0 0
        %782 = vmatmul.mubr.bf16.gmra.mrb[0].mxu0 %v571
        %v783 = vpop.f32.mrb[0].mxu0
        %v784 = vadd.f32 %v595, %v783
        %v785 = vpop.f32.mrb[0].mxu0
        %v786 = vpop.f32.mrb[0].mxu0
        %v787 = vadd.f32 %v595, %v786
        %v788 = vpop.f32.mrb[0].mxu0
        %789 = vmatprep.mubr.bf16.mxu0 0
        %790 = vmatmul.mubr.bf16.gmra.mrb[0].mxu0 %v572
        %v791 = vpop.f32.mrb[0].mxu0
        %v792 = vadd.f32 %v595, %v791
        %v793 = vpop.f32.mrb[0].mxu0
        %v794 = vpop.f32.mrb[0].mxu0
        %v795 = vadd.f32 %v595, %v794
        %v796 = vpop.f32.mrb[0].mxu0
        %797 = vmatprep.mubr.bf16.mxu0 0
        %798 = vmatmul.mubr.bf16.gmra.mrb[0].mxu0 %v573
        %v799 = vpop.f32.mrb[0].mxu0
        %v800 = vadd.f32 %v595, %v799
        %v801 = vpop.f32.mrb[0].mxu0
        %v802 = vpop.f32.mrb[0].mxu0
        %v803 = vadd.f32 %v595, %v802
        %v804 = vpop.f32.mrb[0].mxu0
        %805 = vdwg.mxu0
        %v806 = vadd.f32 %v680, %v246
        %v807 = vadd.f32 %v683, %v247
        %v808 = vadd.f32 %v688, %v248
        %v809 = vadd.f32 %v691, %v249
        %v810 = vadd.f32 %v696, %v250
        %v811 = vadd.f32 %v699, %v251
        %v812 = vadd.f32 %v704, %v252
        %v813 = vadd.f32 %v707, %v253
        %v814 = vadd.f32 %v712, %v254
        %v815 = vadd.f32 %v715, %v255
        %v816 = vadd.f32 %v720, %v256
        %v817 = vadd.f32 %v723, %v257
        %v818 = vadd.f32 %v728, %v258
        %v819 = vadd.f32 %v731, %v259
        %v820 = vadd.f32 %v736, %v260
        %v821 = vadd.f32 %v739, %v261
        %v822 = vadd.f32 %v744, %v262
        %v823 = vadd.f32 %v747, %v263
        %v824 = vadd.f32 %v752, %v264
        %v825 = vadd.f32 %v755, %v265
        %v826 = vadd.f32 %v760, %v266
        %v827 = vadd.f32 %v763, %v267
        %v828 = vadd.f32 %v768, %v268
        %v829 = vadd.f32 %v771, %v269
        %v830 = vadd.f32 %v776, %v270
        %v831 = vadd.f32 %v779, %v271
        %v832 = vadd.f32 %v784, %v272
        %v833 = vadd.f32 %v787, %v273
        %v834 = vadd.f32 %v792, %v274
        %v835 = vadd.f32 %v795, %v275
        %v836 = vadd.f32 %v800, %v276
        %v837 = vadd.f32 %v803, %v277
        %v838 = vmax.f32 %v806, 0.0
        %v839 = vmax.f32 %v807, 0.0
        %v840 = vmax.f32 %v808, 0.0
        %v841 = vmax.f32 %v809, 0.0
        %v842 = vmax.f32 %v810, 0.0
        %v843 = vmax.f32 %v811, 0.0
        %v844 = vmax.f32 %v812, 0.0
        %v845 = vmax.f32 %v813, 0.0
        %v846 = vmax.f32 %v814, 0.0
        %v847 = vmax.f32 %v815, 0.0
        %v848 = vmax.f32 %v816, 0.0
        %v849 = vmax.f32 %v817, 0.0
        %v850 = vmax.f32 %v818, 0.0
        %v851 = vmax.f32 %v819, 0.0
        %v852 = vmax.f32 %v820, 0.0
        %v853 = vmax.f32 %v821, 0.0
        %v854 = vmax.f32 %v822, 0.0
        %v855 = vmax.f32 %v823, 0.0
        %v856 = vmax.f32 %v824, 0.0
        %v857 = vmax.f32 %v825, 0.0
        %v858 = vmax.f32 %v826, 0.0
        %v859 = vmax.f32 %v827, 0.0
        %v860 = vmax.f32 %v828, 0.0
        %v861 = vmax.f32 %v829, 0.0
        %v862 = vmax.f32 %v830, 0.0
        %v863 = vmax.f32 %v831, 0.0
        %v864 = vmax.f32 %v832, 0.0
        %v865 = vmax.f32 %v833, 0.0
        %v866 = vmax.f32 %v834, 0.0
        %v867 = vmax.f32 %v835, 0.0
        %v868 = vmax.f32 %v836, 0.0
        %v869 = vmax.f32 %v837, 0.0
        %870 = vst [vmem:[%s242] sm:$0xff] %v838
        %871 = vst [vmem:[%s242 + $0x8] sm:$0xff] %v839
        %872 = vst [vmem:[%s242 + $0x10] sm:$0xff] %v840
        %873 = vst [vmem:[%s242 + $0x18] sm:$0xff] %v841
        %874 = vst [vmem:[%s242 + $0x20] sm:$0xff] %v842
        %875 = vst [vmem:[%s242 + $0x28] sm:$0xff] %v843
        %876 = vst [vmem:[%s242 + $0x30] sm:$0xff] %v844
        %877 = vst [vmem:[%s242 + $0x38] sm:$0xff] %v845
        %878 = vst [vmem:[%s242 + $0x40] sm:$0xff] %v846
        %879 = vst [vmem:[%s242 + $0x48] sm:$0xff] %v847
        %880 = vst [vmem:[%s242 + $0x50] sm:$0xff] %v848
        %881 = vst [vmem:[%s242 + $0x58] sm:$0xff] %v849
        %882 = vst [vmem:[%s242 + $0x60] sm:$0xff] %v850
        %883 = vst [vmem:[%s242 + $0x68] sm:$0xff] %v851
        %884 = vst [vmem:[%s242 + $0x70] sm:$0xff] %v852
        %885 = vst [vmem:[%s242 + $0x78] sm:$0xff] %v853
        %886 = vst [vmem:[%s242 + $0x80] sm:$0xff] %v854
        %887 = vst [vmem:[%s242 + $0x88] sm:$0xff] %v855
        %888 = vst [vmem:[%s242 + $0x90] sm:$0xff] %v856
        %889 = vst [vmem:[%s242 + $0x98] sm:$0xff] %v857
        %890 = vst [vmem:[%s242 + $0xa0] sm:$0xff] %v858
        %891 = vst [vmem:[%s242 + $0xa8] sm:$0xff] %v859
        %892 = vst [vmem:[%s242 + $0xb0] sm:$0xff] %v860
        %893 = vst [vmem:[%s242 + $0xb8] sm:$0xff] %v861
        %894 = vst [vmem:[%s242 + $0xc0] sm:$0xff] %v862
        %895 = vst [vmem:[%s242 + $0xc8] sm:$0xff] %v863
        %896 = vst [vmem:[%s242 + $0xd0] sm:$0xff] %v864
        %897 = vst [vmem:[%s242 + $0xd8] sm:$0xff] %v865
        %898 = vst [vmem:[%s242 + $0xe0] sm:$0xff] %v866
        %899 = vst [vmem:[%s242 + $0xe8] sm:$0xff] %v867
        %900 = vst [vmem:[%s242 + $0xf0] sm:$0xff] %v868
        %901 = vst [vmem:[%s242 + $0xf8] sm:$0xff] %v869
        %s902 = sand.u32 %s140, 1
        %s903 = scalar_lea.sflag [#allocation4], %s902
        %s904 = sand.u32 %s140, 1
        %s905 = smul.addr %s904, 256
        %s906 = scalar_lea.vmem [#allocation5], %s905
        // Predicated region
        $region45: #{resblock_forward.1} parent=39 // pred_check
          %p907 = pneg %p150
        $region46: #{resblock_forward.1} parent=39 // pred_check_branch
          %909 = sbr.rel (%p907) target = $region48
        $region47: #{resblock_forward.1} parent=39 // pred_region
          %s910 = smul.u32 32, %s22
          %s912 = ssub.s32 4096, 4096
          %913 = vsyncadd %s903, %s912
          %s914 = smul.addr %s910, 128
          %s915 = scalar_lea.hbm %s5, %s914
          %s916 = sshll.u32 %s906, 4
          %s917 = int_to_ptr.vmem [resolvable:$true] %s916
          %922 = dma.vmem_to_hbm [thread:$0]  %s917, 4096, %s915, %s903, 128, 128, 8
        $region48: #{resblock_forward.1} parent=39 // pred_fallthru
          _
      $region40: #{resblock_forward.1} parent=5 // pred_fallthru
        _
      %p923 = scmp.le.s32.totalorder 2, %s17
      // Predicated region
      $region49: #{resblock_forward.1} parent=5 // pred_check
        %p924 = pneg %p923
      $region50: #{resblock_forward.1} parent=5 // pred_check_branch
        %926 = sbr.rel (%p924) target = $region52
      $region51: #{resblock_forward.1} parent=5 // pred_region
        %s927 = ssub.s32 %s17, 2
        // Predicated region
        $region53: #{resblock_forward.1} parent=51 // pred_check
          %p928 = pneg %p156
        $region54: #{resblock_forward.1} parent=51 // pred_check_branch
          %930 = sbr.rel (%p928) target = $region56
        $region55: #{resblock_forward.1} parent=51 // pred_region
          %s931 = sand.u32 %s141, 1
          %s932 = scalar_lea.sflag [#allocation4], %s931
          %s933 = sand.u32 %s141, 1
          %s934 = smul.addr %s933, 256
          %s935 = scalar_lea.vmem [#allocation5], %s934
          %936 = dma.done %s932, 4096
        $region56: #{resblock_forward.1} parent=51 // pred_fallthru
          _
      $region52: #{resblock_forward.1} parent=5 // pred_fallthru
        _
    $region6: #{resblock_forward.1} parent=1 // loop_footer
      %s21 = sadd.s32 1, %s17
    $region7: #{resblock_forward.1} parent=1 // loop_footer_branch
      %16 = sbr.rel target = $region3
    $region8: #{resblock_forward.1} parent=1 // loop_exit
      _
    %937 = vsyncpa [#allocation3], 1
    %s938 = scalar_lea.sflag [#allocation3], 1
    %939 = vsyncpa %s938, 1
    %940 = vsyncpa [#allocation4], 1
    %s941 = scalar_lea.sflag [#allocation4], 1
    %942 = vsyncpa %s941, 1

</llo_original>
